<compile_context>
chip_gen: v6e
topology: v6e:2x2x1
jax: 0.10.0
libtpu: 0.0.40
codegen_flags: <defaults>
</compile_context>

<pallas_src>
import jax
import jax.numpy as jnp
from jax.experimental import pallas as pl
from jax.experimental.pallas import tpu as pltpu


def _make_abs_kernel(n: int):
    """Kernel over an (n,) SMEM-resident array of scalar parameters."""
    def kernel(p_ref, o_ref):
        # n is tiny (number of scalar parameters); unrolled scalar ops on the
        # SMEM sld/sst path — no VMEM tile, no masked vst.
        for i in range(n):
            o_ref[i] = jnp.abs(p_ref[i])
    return kernel


def _abs_pallas(params_1d: jax.Array) -> jax.Array:
    """|x| for a 1-D array of scalar parameters, one pallas_call total."""
    n = params_1d.shape[0]
    dt = params_1d.dtype
    return pl.pallas_call(
        _make_abs_kernel(n),
        out_shape=jax.ShapeDtypeStruct((n,), dt),
        in_specs=[pl.BlockSpec(memory_space=pltpu.MemorySpace.SMEM)],
        out_specs=pl.BlockSpec(memory_space=pltpu.MemorySpace.SMEM),
        cost_estimate=pl.CostEstimate(
            flops=n, transcendentals=0, bytes_accessed=2 * n * dt.itemsize),
    )(params_1d)


@jax.custom_vjp
def positive_parameter_forward(param_scalar: jax.Array) -> jax.Array:
    """Equivalent of PositiveParameter.forward(): returns |param| as a scalar."""
    return _abs_pallas(jnp.reshape(param_scalar, (1,)))[0]


def _positive_parameter_fwd(param_scalar):
    return positive_parameter_forward(param_scalar), param_scalar


def _positive_parameter_bwd(param_scalar, g):
    # d|p|/dp = sign(p); sign(0) = 0 (usual subgradient convention).
    return (jnp.sign(param_scalar) * g,)


positive_parameter_forward.defvjp(_positive_parameter_fwd,
                                  _positive_parameter_bwd)


# Batched helper: if a model owns several PositiveParameter-style scalars,
# pack them into one (N,) array and call this once (single dispatch).
@jax.jit
def positive_parameters_forward_batched(params_1d: jax.Array) -> jax.Array:
    return _abs_pallas(params_1d)


if __name__ == "__main__":
    # Deterministic parameter init, matching nn.Parameter(torch.tensor(1.5)).
    # (PRNGKey(0) created per instructions; the module init is a fixed
    #  constant, so no random draw is needed.)
    _ = jax.random.PRNGKey(0)
    parameter = jnp.asarray(1.5, dtype=jnp.float32)

    fwd = jax.jit(positive_parameter_forward)
    result = jax.block_until_ready(fwd(parameter))
    expected = jnp.abs(parameter)
    assert result.shape == ()
    assert result.dtype == parameter.dtype
    assert jnp.allclose(result, expected), (result, expected)

    # Gradient check via the custom VJP: d|p|/dp at p=-2.0 is -1.0.
    grad = jax.block_until_ready(
        jax.grad(positive_parameter_forward)(jnp.asarray(-2.0, jnp.float32)))
    assert jnp.allclose(grad, -1.0), grad

    # Batched path: several scalar parameters handled in one pallas_call.
    batch = jnp.asarray([1.5, -0.25, -3.0, 0.0], dtype=jnp.float32)
    out_b = jax.block_until_ready(positive_parameters_forward_batched(batch))
    assert jnp.allclose(out_b, jnp.abs(batch)), (out_b, jnp.abs(batch))

    print("KERNEL_OK")
</pallas_src>

<mosaic_0001>
module attributes {stable_mosaic.version = 11 : i64} {
  func.func @kernel(%arg0: memref<1xf32, #tpu.memory_space<smem>>, %arg1: memref<1xf32, #tpu.memory_space<smem>>) attributes {dimension_semantics = [], scalar_prefetch = 0 : i64, scratch_operands = 0 : i64, tpu.core_type = #tpu.core_type<tc>} {
    %c0 = arith.constant 0 : index
    %0 = memref.load %arg0[%c0] : memref<1xf32, #tpu.memory_space<smem>>
    %1 = math.absf %0 : f32
    %c0_0 = arith.constant 0 : index
    %2 = memref.load %arg1[%c0_0] : memref<1xf32, #tpu.memory_space<smem>>
    memref.store %1, %arg1[%c0_0] : memref<1xf32, #tpu.memory_space<smem>>
    return
  }
}

</mosaic_0001>

<llo_original>
// kernel: positive_parameter_forward.1
$region0: #{positive_parameter_forward.1}
  #allocation0 [shape = 'u32[]', space=smem, size = 0x4, offset = 0x4, fixed_abs, tag = 'smem constant byte address 0x4 - core index']
  #allocation1 [shape = 'u32[144,128]{1,0:T(1,128)}', space=vmem, size = 0x12000, scoped, tag = 'internal scratch']
  #allocation2 [shape = 'f32[1]{0:T(128)S(6)}', space=smem, size = 0x200, scoped, tag = 'scoped memory for positive_parameter_forward.1']
  %s0 = inlined_call_operand.<no memory space> [shape: f32[1], index: 0, kind: input, shape index: {}]
  %s1 = inlined_call_operand.hbm [shape: f32[1], index: 1, kind: output, shape index: {}]
  %s2 = sld [smem:[#allocation0]]
  $region14: #{positive_parameter_forward.1} parent=0
    _
  %s4 = ssub.s32 1, %s2
  %s5 = scalar_select 0, %s4, %s2
  %6 = sst [smem:[#allocation2]] %s0
  $region1: #{positive_parameter_forward.1} parent=0
    #allocation3 [shape = 'u8[512]{0}', space=smem, size = 0x200, scoped, tag = 'output window, operand 0, single buffered']
    #allocation4 [shape = 's32[1]{0}', space=sflag, size = 0x4, scoped, tag = 'scoped memory for positive_parameter_forward.1']
    %7 = vsyncpa [#allocation4], 0
    // Predicated region
    $region2: #{positive_parameter_forward.1} parent=1 // pred_check
      _
    $region3: #{positive_parameter_forward.1} parent=1 // pred_check_branch
      %9 = sbr.rel (0) target = $region5
    $region4: #{positive_parameter_forward.1} parent=1 // pred_region
      _
    $region5: #{positive_parameter_forward.1} parent=1 // pred_fallthru
      _
    %s10 = sld [smem:[#allocation2]]
    %s11 = sand.u32 2147483647, %s10
    %s12 = scalar_lea.smem [#allocation3], 0
    %13 = sst [smem:[%s12]] %s11
    // Predicated region
    $region6: #{positive_parameter_forward.1} parent=1 // pred_check
      _
    $region7: #{positive_parameter_forward.1} parent=1 // pred_check_branch
      %15 = sbr.rel (0) target = $region9
    $region8: #{positive_parameter_forward.1} parent=1 // pred_region
      %s17 = ssub.s32 16, 16
      %18 = vsyncadd [#allocation4], %s17
      %21 = dma.smem_to_hbm [#allocation3], 16, %s1, [#allocation4]
    $region9: #{positive_parameter_forward.1} parent=1 // pred_fallthru
      _
    // Predicated region
    $region10: #{positive_parameter_forward.1} parent=1 // pred_check
      _
    $region11: #{positive_parameter_forward.1} parent=1 // pred_check_branch
      %23 = sbr.rel (0) target = $region13
    $region12: #{positive_parameter_forward.1} parent=1 // pred_region
      %24 = dma.done [#allocation4], 16
    $region13: #{positive_parameter_forward.1} parent=1 // pred_fallthru
      _
    %25 = sfence
    %26 = vsyncpa [#allocation4], 1

</llo_original>
